<compile_context>
chip_gen: v5e
topology: v5e:2x2
jax: 0.10.0
libtpu: 0.0.40
codegen_flags: <defaults>
</compile_context>

<pallas_src>
import functools

import jax
import jax.numpy as jnp
from jax.experimental import pallas as pl
from jax.experimental.pallas import tpu as pltpu


def _round_up(n, m):
    return ((n + m - 1) // m) * m


def _self_attention_kernel(x_ref, wq_ref, wk_ref, wv_ref, wl_ref, o_ref, *,
                           num_heads, head_dim):
    # x block: (TM, D) in the compute dtype (bf16 by default); weights: (D, D) in
    # (in, out) layout.  All MXU results accumulate in f32.
    x = x_ref[...]
    q = jnp.dot(x, wq_ref[...], preferred_element_type=jnp.float32)   # (TM, D) f32
    k = jnp.dot(x, wk_ref[...], preferred_element_type=jnp.float32)   # (TM, D) f32
    v = jnp.dot(x, wv_ref[...], preferred_element_type=jnp.float32)   # (TM, D) f32

    # Fold the 1/sqrt(head_dim) scale into q once (one VPU multiply).
    q = q * (1.0 / (head_dim ** 0.5))

    H, Dh = num_heads, head_dim

    # Per-token attention over the (small, static) head axis — unrolled over heads,
    # but each head works on a lane-dense (TM, H) energy matrix and a single
    # max/exp/sum/reciprocal, and all per-head contexts feed ONE output projection.
    ctx_heads = []
    for h in range(H):
        qh = q[:, h * Dh:(h + 1) * Dh]                                 # (TM, Dh)
        # energies of head h against every head g, per token -> (TM, H)
        e_h = jnp.concatenate(
            [jnp.sum(qh * k[:, g * Dh:(g + 1) * Dh], axis=1, keepdims=True)
             for g in range(H)],
            axis=1)
        m_h = jnp.max(e_h, axis=1, keepdims=True)                      # (TM, 1)
        p_h = jnp.exp(e_h - m_h)                                       # (TM, H) EUP
        denom = jnp.sum(p_h, axis=1, keepdims=True)                    # (TM, 1)
        a_h = p_h * pl.reciprocal(denom, approx=True)                  # (TM, H)

        # context vector for head h: sum_g softmax_hg * v_g
        c_h = a_h[:, 0:1] * v[:, 0:Dh]
        for g in range(1, H):
            c_h = c_h + a_h[:, g:g + 1] * v[:, g * Dh:(g + 1) * Dh]
        ctx_heads.append(c_h)

    ctx = jnp.concatenate(ctx_heads, axis=1)                           # (TM, D) f32

    # Single full-depth output projection (K = D) on the MXU.
    out = jnp.dot(ctx.astype(wl_ref.dtype), wl_ref[...],
                  preferred_element_type=jnp.float32)
    o_ref[...] = out.astype(o_ref.dtype)


def self_attention_pallas(x, wq_t, wk_t, wv_t, wl_t, num_heads, *,
                          token_tile=256, use_bf16=True):
    """x: (B, S, D); w*_t: (D_in, D_out) = torch_weight.T (bias-free Linear)."""
    B, S, D = x.shape
    assert D % num_heads == 0
    head_dim = D // num_heads
    M = B * S

    # Compute dtype for the MXU inputs; f32 accumulation & softmax stay in-kernel.
    cdt = jnp.bfloat16 if use_bf16 else x.dtype
    sub = 16 if cdt == jnp.bfloat16 else 8            # sublane packing granularity

    # Big token tiles feed the MXU and amortize per-grid-step overhead; cap for tiny
    # inputs and pad M to a tile multiple (no divisibility requirement on B*S).
    tile = max(sub, min(token_tile, _round_up(M, sub)))
    tile = _round_up(tile, sub)
    M_pad = _round_up(M, tile)

    x2 = x.reshape(M, D).astype(cdt)
    if M_pad != M:
        x2 = jnp.pad(x2, ((0, M_pad - M), (0, 0)))

    wq = wq_t.astype(cdt)
    wk = wk_t.astype(cdt)
    wv = wv_t.astype(cdt)
    wl = wl_t.astype(cdt)

    kernel = functools.partial(_self_attention_kernel,
                               num_heads=num_heads, head_dim=head_dim)

    # Weights are grid-invariant (constant index_map), so they are DMA'd once and
    # stay VMEM-resident across token tiles.  (For large D, tile the output dim of
    # the weights / single-buffer them to fit v7x's 64 MiB VMEM.)
    w_spec = pl.BlockSpec((D, D), lambda i: (0, 0))

    out = pl.pallas_call(
        kernel,
        out_shape=jax.ShapeDtypeStruct((M_pad, D), x.dtype),
        grid_spec=pltpu.PrefetchScalarGridSpec(
            num_scalar_prefetch=0,
            grid=(M_pad // tile,),
            in_specs=[
                pl.BlockSpec((tile, D), lambda i: (i, 0)),   # x token tile
                w_spec,                                      # Wq^T
                w_spec,                                      # Wk^T
                w_spec,                                      # Wv^T
                w_spec,                                      # Wl^T
            ],
            out_specs=pl.BlockSpec((tile, D), lambda i: (i, 0)),
        ),
        compiler_params=pltpu.CompilerParams(
            dimension_semantics=("parallel",),
            vmem_limit_bytes=32 * 1024 * 1024),
    )(x2, wq, wk, wv, wl)

    if M_pad != M:
        out = out[:M]
    return out.reshape(B, S, D)


def self_attention_reference(x, Wq, Wk, Wv, Wl, num_heads):
    """Pure-JAX mirror of the PyTorch forward (weights in torch (out, in) layout)."""
    B, S, D = x.shape
    hd = D // num_heads
    q = (x @ Wq.T).reshape(B, S, num_heads, hd)
    k = (x @ Wk.T).reshape(B, S, num_heads, hd)
    v = (x @ Wv.T).reshape(B, S, num_heads, hd)
    e = jnp.einsum('bshd,bsgd->bshg', q, k) / (hd ** 0.5)
    a = jax.nn.softmax(e, axis=-1)
    c = jnp.einsum('bshg,bsgd->bshd', a, v).reshape(B, S, D)
    return c @ Wl.T


if __name__ == "__main__":
    B, S, D, H = 2, 8, 32, 4   # batch, seq, input_size, num_heads

    key = jax.random.PRNGKey(0)
    kx, kq, kk, kv, kl = jax.random.split(key, 5)

    x = jax.random.normal(kx, (B, S, D), dtype=jnp.float32)
    # nn.Linear(D, D, bias=False) weights: (out, in), init ~ U(-1/sqrt(D), 1/sqrt(D))
    bound = 1.0 / (D ** 0.5)
    Wq = jax.random.uniform(kq, (D, D), jnp.float32, -bound, bound)
    Wk = jax.random.uniform(kk, (D, D), jnp.float32, -bound, bound)
    Wv = jax.random.uniform(kv, (D, D), jnp.float32, -bound, bound)
    Wl = jax.random.uniform(kl, (D, D), jnp.float32, -bound, bound)

    ref = self_attention_reference(x, Wq, Wk, Wv, Wl, H)

    # f32 matmul-input path (tighter numerics; approx reciprocal still in play).
    out_f32 = self_attention_pallas(x, Wq.T, Wk.T, Wv.T, Wl.T, H, use_bf16=False)
    out_f32 = jax.block_until_ready(out_f32)
    assert out_f32.shape == (B, S, D)
    assert jnp.allclose(out_f32, ref, atol=1e-2, rtol=1e-2), "f32 path mismatch"

    # Default (bf16 MXU inputs, f32 accumulation) path.
    out_bf16 = self_attention_pallas(x, Wq.T, Wk.T, Wv.T, Wl.T, H)
    out_bf16 = jax.block_until_ready(out_bf16)
    assert out_bf16.shape == (B, S, D)
    assert jnp.allclose(out_bf16, ref, atol=3e-2, rtol=3e-2), "bf16 path mismatch"

    print("KERNEL_OK")
</pallas_src>

<mosaic_0001>
module attributes {stable_mosaic.version = 11 : i64} {
  func.func @_self_attention_kernel(%arg0: i32, %arg1: memref<16x32xf32, #tpu.memory_space<vmem>>, %arg2: memref<32x32xf32, #tpu.memory_space<vmem>>, %arg3: memref<32x32xf32, #tpu.memory_space<vmem>>, %arg4: memref<32x32xf32, #tpu.memory_space<vmem>>, %arg5: memref<32x32xf32, #tpu.memory_space<vmem>>, %arg6: memref<16x32xf32, #tpu.memory_space<vmem>>) attributes {dimension_semantics = [#tpu.dimension_semantics<parallel>], iteration_bounds = array<i64: 1>, scalar_prefetch = 0 : i64, scratch_operands = 0 : i64, tpu.core_type = #tpu.core_type<tc>, window_params = [{transform_indices = @transform_0, window_bounds = array<i64: 16, 32>}, {pipeline_mode = #tpu.pipeline_mode<synchronous>, transform_indices = @transform_1, window_bounds = array<i64: 32, 32>}, {pipeline_mode = #tpu.pipeline_mode<synchronous>, transform_indices = @transform_2, window_bounds = array<i64: 32, 32>}, {pipeline_mode = #tpu.pipeline_mode<synchronous>, transform_indices = @transform_3, window_bounds = array<i64: 32, 32>}, {pipeline_mode = #tpu.pipeline_mode<synchronous>, transform_indices = @transform_4, window_bounds = array<i64: 32, 32>}, {transform_indices = @transform_5, window_bounds = array<i64: 16, 32>}]} {
    %c0 = arith.constant 0 : index
    %c0_0 = arith.constant 0 : index
    %0 = vector.load %arg1[%c0, %c0_0] : memref<16x32xf32, #tpu.memory_space<vmem>>, vector<16x32xf32>
    %c0_1 = arith.constant 0 : index
    %c0_2 = arith.constant 0 : index
    %1 = vector.load %arg2[%c0_1, %c0_2] : memref<32x32xf32, #tpu.memory_space<vmem>>, vector<32x32xf32>
    %cst = arith.constant dense<0.000000e+00> : vector<16x32xf32>
    %2 = tpu.matmul %0, %1, %cst {dimension_numbers = #tpu.dot_dimension_numbers<[1], [0], [0], [1], [0, 0, 1, 1], [], []>} : vector<16x32xf32>, vector<32x32xf32>, vector<16x32xf32> -> vector<16x32xf32>
    %c0_3 = arith.constant 0 : index
    %c0_4 = arith.constant 0 : index
    %3 = vector.load %arg3[%c0_3, %c0_4] : memref<32x32xf32, #tpu.memory_space<vmem>>, vector<32x32xf32>
    %cst_5 = arith.constant dense<0.000000e+00> : vector<16x32xf32>
    %4 = tpu.matmul %0, %3, %cst_5 {dimension_numbers = #tpu.dot_dimension_numbers<[1], [0], [0], [1], [0, 0, 1, 1], [], []>} : vector<16x32xf32>, vector<32x32xf32>, vector<16x32xf32> -> vector<16x32xf32>
    %c0_6 = arith.constant 0 : index
    %c0_7 = arith.constant 0 : index
    %5 = vector.load %arg4[%c0_6, %c0_7] : memref<32x32xf32, #tpu.memory_space<vmem>>, vector<32x32xf32>
    %cst_8 = arith.constant dense<0.000000e+00> : vector<16x32xf32>
    %6 = tpu.matmul %0, %5, %cst_8 {dimension_numbers = #tpu.dot_dimension_numbers<[1], [0], [0], [1], [0, 0, 1, 1], [], []>} : vector<16x32xf32>, vector<32x32xf32>, vector<16x32xf32> -> vector<16x32xf32>
    %cst_9 = arith.constant 0.353553385 : f32
    %7 = vector.broadcast %cst_9 : f32 to vector<16x32xf32>
    %8 = arith.mulf %2, %7 : vector<16x32xf32>
    %9 = vector.extract_strided_slice %8 {offsets = [0, 0], sizes = [16, 8], strides = [1, 1]} : vector<16x32xf32> to vector<16x8xf32>
    %10 = vector.extract_strided_slice %4 {offsets = [0, 0], sizes = [16, 8], strides = [1, 1]} : vector<16x32xf32> to vector<16x8xf32>
    %11 = arith.mulf %9, %10 : vector<16x8xf32>
    %cst_10 = arith.constant dense<0.000000e+00> : vector<16xf32>
    %12 = vector.multi_reduction <add>, %11, %cst_10 [1] : vector<16x8xf32> to vector<16xf32>
    %13 = vector.shape_cast %12 : vector<16xf32> to vector<16x1xf32>
    %14 = vector.extract_strided_slice %4 {offsets = [0, 8], sizes = [16, 8], strides = [1, 1]} : vector<16x32xf32> to vector<16x8xf32>
    %15 = arith.mulf %9, %14 : vector<16x8xf32>
    %cst_11 = arith.constant dense<0.000000e+00> : vector<16xf32>
    %16 = vector.multi_reduction <add>, %15, %cst_11 [1] : vector<16x8xf32> to vector<16xf32>
    %17 = vector.shape_cast %16 : vector<16xf32> to vector<16x1xf32>
    %18 = vector.extract_strided_slice %4 {offsets = [0, 16], sizes = [16, 8], strides = [1, 1]} : vector<16x32xf32> to vector<16x8xf32>
    %19 = arith.mulf %9, %18 : vector<16x8xf32>
    %cst_12 = arith.constant dense<0.000000e+00> : vector<16xf32>
    %20 = vector.multi_reduction <add>, %19, %cst_12 [1] : vector<16x8xf32> to vector<16xf32>
    %21 = vector.shape_cast %20 : vector<16xf32> to vector<16x1xf32>
    %22 = vector.extract_strided_slice %4 {offsets = [0, 24], sizes = [16, 8], strides = [1, 1]} : vector<16x32xf32> to vector<16x8xf32>
    %23 = arith.mulf %9, %22 : vector<16x8xf32>
    %cst_13 = arith.constant dense<0.000000e+00> : vector<16xf32>
    %24 = vector.multi_reduction <add>, %23, %cst_13 [1] : vector<16x8xf32> to vector<16xf32>
    %25 = vector.shape_cast %24 : vector<16xf32> to vector<16x1xf32>
    %26 = tpu.concatenate %13, %17, %21, %25 in 1 : vector<16x1xf32>, vector<16x1xf32>, vector<16x1xf32>, vector<16x1xf32> -> vector<16x4xf32>
    %cst_14 = arith.constant dense<0xFF800000> : vector<16xf32>
    %27 = vector.multi_reduction <maximumf>, %26, %cst_14 [1] : vector<16x4xf32> to vector<16xf32>
    %28 = vector.shape_cast %27 : vector<16xf32> to vector<16x1xf32>
    %29 = vector.broadcast %28 : vector<16x1xf32> to vector<16x4xf32>
    %30 = arith.subf %26, %29 : vector<16x4xf32>
    %31 = math.exp %30 : vector<16x4xf32>
    %cst_15 = arith.constant dense<0.000000e+00> : vector<16xf32>
    %32 = vector.multi_reduction <add>, %31, %cst_15 [1] : vector<16x4xf32> to vector<16xf32>
    %33 = vector.shape_cast %32 : vector<16xf32> to vector<16x1xf32>
    %34 = tpu.reciprocal %33 {approx = true} : vector<16x1xf32> -> vector<16x1xf32>
    %35 = vector.broadcast %34 : vector<16x1xf32> to vector<16x4xf32>
    %36 = arith.mulf %31, %35 : vector<16x4xf32>
    %37 = vector.extract_strided_slice %36 {offsets = [0, 0], sizes = [16, 1], strides = [1, 1]} : vector<16x4xf32> to vector<16x1xf32>
    %38 = vector.extract_strided_slice %6 {offsets = [0, 0], sizes = [16, 8], strides = [1, 1]} : vector<16x32xf32> to vector<16x8xf32>
    %39 = vector.broadcast %37 : vector<16x1xf32> to vector<16x8xf32>
    %40 = arith.mulf %39, %38 : vector<16x8xf32>
    %41 = vector.extract_strided_slice %36 {offsets = [0, 1], sizes = [16, 1], strides = [1, 1]} : vector<16x4xf32> to vector<16x1xf32>
    %42 = vector.extract_strided_slice %6 {offsets = [0, 8], sizes = [16, 8], strides = [1, 1]} : vector<16x32xf32> to vector<16x8xf32>
    %43 = vector.broadcast %41 : vector<16x1xf32> to vector<16x8xf32>
    %44 = arith.mulf %43, %42 : vector<16x8xf32>
    %45 = arith.addf %40, %44 : vector<16x8xf32>
    %46 = vector.extract_strided_slice %36 {offsets = [0, 2], sizes = [16, 1], strides = [1, 1]} : vector<16x4xf32> to vector<16x1xf32>
    %47 = vector.extract_strided_slice %6 {offsets = [0, 16], sizes = [16, 8], strides = [1, 1]} : vector<16x32xf32> to vector<16x8xf32>
    %48 = vector.broadcast %46 : vector<16x1xf32> to vector<16x8xf32>
    %49 = arith.mulf %48, %47 : vector<16x8xf32>
    %50 = arith.addf %45, %49 : vector<16x8xf32>
    %51 = vector.extract_strided_slice %36 {offsets = [0, 3], sizes = [16, 1], strides = [1, 1]} : vector<16x4xf32> to vector<16x1xf32>
    %52 = vector.extract_strided_slice %6 {offsets = [0, 24], sizes = [16, 8], strides = [1, 1]} : vector<16x32xf32> to vector<16x8xf32>
    %53 = vector.broadcast %51 : vector<16x1xf32> to vector<16x8xf32>
    %54 = arith.mulf %53, %52 : vector<16x8xf32>
    %55 = arith.addf %50, %54 : vector<16x8xf32>
    %56 = vector.extract_strided_slice %8 {offsets = [0, 8], sizes = [16, 8], strides = [1, 1]} : vector<16x32xf32> to vector<16x8xf32>
    %57 = vector.extract_strided_slice %4 {offsets = [0, 0], sizes = [16, 8], strides = [1, 1]} : vector<16x32xf32> to vector<16x8xf32>
    %58 = arith.mulf %56, %57 : vector<16x8xf32>
    %cst_16 = arith.constant dense<0.000000e+00> : vector<16xf32>
    %59 = vector.multi_reduction <add>, %58, %cst_16 [1] : vector<16x8xf32> to vector<16xf32>
    %60 = vector.shape_cast %59 : vector<16xf32> to vector<16x1xf32>
    %61 = vector.extract_strided_slice %4 {offsets = [0, 8], sizes = [16, 8], strides = [1, 1]} : vector<16x32xf32> to vector<16x8xf32>
    %62 = arith.mulf %56, %61 : vector<16x8xf32>
    %cst_17 = arith.constant dense<0.000000e+00> : vector<16xf32>
    %63 = vector.multi_reduction <add>, %62, %cst_17 [1] : vector<16x8xf32> to vector<16xf32>
    %64 = vector.shape_cast %63 : vector<16xf32> to vector<16x1xf32>
    %65 = vector.extract_strided_slice %4 {offsets = [0, 16], sizes = [16, 8], strides = [1, 1]} : vector<16x32xf32> to vector<16x8xf32>
    %66 = arith.mulf %56, %65 : vector<16x8xf32>
    %cst_18 = arith.constant dense<0.000000e+00> : vector<16xf32>
    %67 = vector.multi_reduction <add>, %66, %cst_18 [1] : vector<16x8xf32> to vector<16xf32>
    %68 = vector.shape_cast %67 : vector<16xf32> to vector<16x1xf32>
    %69 = vector.extract_strided_slice %4 {offsets = [0, 24], sizes = [16, 8], strides = [1, 1]} : vector<16x32xf32> to vector<16x8xf32>
    %70 = arith.mulf %56, %69 : vector<16x8xf32>
    %cst_19 = arith.constant dense<0.000000e+00> : vector<16xf32>
    %71 = vector.multi_reduction <add>, %70, %cst_19 [1] : vector<16x8xf32> to vector<16xf32>
    %72 = vector.shape_cast %71 : vector<16xf32> to vector<16x1xf32>
    %73 = tpu.concatenate %60, %64, %68, %72 in 1 : vector<16x1xf32>, vector<16x1xf32>, vector<16x1xf32>, vector<16x1xf32> -> vector<16x4xf32>
    %cst_20 = arith.constant dense<0xFF800000> : vector<16xf32>
    %74 = vector.multi_reduction <maximumf>, %73, %cst_20 [1] : vector<16x4xf32> to vector<16xf32>
    %75 = vector.shape_cast %74 : vector<16xf32> to vector<16x1xf32>
    %76 = vector.broadcast %75 : vector<16x1xf32> to vector<16x4xf32>
    %77 = arith.subf %73, %76 : vector<16x4xf32>
    %78 = math.exp %77 : vector<16x4xf32>
    %cst_21 = arith.constant dense<0.000000e+00> : vector<16xf32>
    %79 = vector.multi_reduction <add>, %78, %cst_21 [1] : vector<16x4xf32> to vector<16xf32>
    %80 = vector.shape_cast %79 : vector<16xf32> to vector<16x1xf32>
    %81 = tpu.reciprocal %80 {approx = true} : vector<16x1xf32> -> vector<16x1xf32>
    %82 = vector.broadcast %81 : vector<16x1xf32> to vector<16x4xf32>
    %83 = arith.mulf %78, %82 : vector<16x4xf32>
    %84 = vector.extract_strided_slice %83 {offsets = [0, 0], sizes = [16, 1], strides = [1, 1]} : vector<16x4xf32> to vector<16x1xf32>
    %85 = vector.extract_strided_slice %6 {offsets = [0, 0], sizes = [16, 8], strides = [1, 1]} : vector<16x32xf32> to vector<16x8xf32>
    %86 = vector.broadcast %84 : vector<16x1xf32> to vector<16x8xf32>
    %87 = arith.mulf %86, %85 : vector<16x8xf32>
    %88 = vector.extract_strided_slice %83 {offsets = [0, 1], sizes = [16, 1], strides = [1, 1]} : vector<16x4xf32> to vector<16x1xf32>
    %89 = vector.extract_strided_slice %6 {offsets = [0, 8], sizes = [16, 8], strides = [1, 1]} : vector<16x32xf32> to vector<16x8xf32>
    %90 = vector.broadcast %88 : vector<16x1xf32> to vector<16x8xf32>
    %91 = arith.mulf %90, %89 : vector<16x8xf32>
    %92 = arith.addf %87, %91 : vector<16x8xf32>
    %93 = vector.extract_strided_slice %83 {offsets = [0, 2], sizes = [16, 1], strides = [1, 1]} : vector<16x4xf32> to vector<16x1xf32>
    %94 = vector.extract_strided_slice %6 {offsets = [0, 16], sizes = [16, 8], strides = [1, 1]} : vector<16x32xf32> to vector<16x8xf32>
    %95 = vector.broadcast %93 : vector<16x1xf32> to vector<16x8xf32>
    %96 = arith.mulf %95, %94 : vector<16x8xf32>
    %97 = arith.addf %92, %96 : vector<16x8xf32>
    %98 = vector.extract_strided_slice %83 {offsets = [0, 3], sizes = [16, 1], strides = [1, 1]} : vector<16x4xf32> to vector<16x1xf32>
    %99 = vector.extract_strided_slice %6 {offsets = [0, 24], sizes = [16, 8], strides = [1, 1]} : vector<16x32xf32> to vector<16x8xf32>
    %100 = vector.broadcast %98 : vector<16x1xf32> to vector<16x8xf32>
    %101 = arith.mulf %100, %99 : vector<16x8xf32>
    %102 = arith.addf %97, %101 : vector<16x8xf32>
    %103 = vector.extract_strided_slice %8 {offsets = [0, 16], sizes = [16, 8], strides = [1, 1]} : vector<16x32xf32> to vector<16x8xf32>
    %104 = vector.extract_strided_slice %4 {offsets = [0, 0], sizes = [16, 8], strides = [1, 1]} : vector<16x32xf32> to vector<16x8xf32>
    %105 = arith.mulf %103, %104 : vector<16x8xf32>
    %cst_22 = arith.constant dense<0.000000e+00> : vector<16xf32>
    %106 = vector.multi_reduction <add>, %105, %cst_22 [1] : vector<16x8xf32> to vector<16xf32>
    %107 = vector.shape_cast %106 : vector<16xf32> to vector<16x1xf32>
    %108 = vector.extract_strided_slice %4 {offsets = [0, 8], sizes = [16, 8], strides = [1, 1]} : vector<16x32xf32> to vector<16x8xf32>
    %109 = arith.mulf %103, %108 : vector<16x8xf32>
    %cst_23 = arith.constant dense<0.000000e+00> : vector<16xf32>
    %110 = vector.multi_reduction <add>, %109, %cst_23 [1] : vector<16x8xf32> to vector<16xf32>
    %111 = vector.shape_cast %110 : vector<16xf32> to vector<16x1xf32>
    %112 = vector.extract_strided_slice %4 {offsets = [0, 16], sizes = [16, 8], strides = [1, 1]} : vector<16x32xf32> to vector<16x8xf32>
    %113 = arith.mulf %103, %112 : vector<16x8xf32>
    %cst_24 = arith.constant dense<0.000000e+00> : vector<16xf32>
    %114 = vector.multi_reduction <add>, %113, %cst_24 [1] : vector<16x8xf32> to vector<16xf32>
    %115 = vector.shape_cast %114 : vector<16xf32> to vector<16x1xf32>
    %116 = vector.extract_strided_slice %4 {offsets = [0, 24], sizes = [16, 8], strides = [1, 1]} : vector<16x32xf32> to vector<16x8xf32>
    %117 = arith.mulf %103, %116 : vector<16x8xf32>
    %cst_25 = arith.constant dense<0.000000e+00> : vector<16xf32>
    %118 = vector.multi_reduction <add>, %117, %cst_25 [1] : vector<16x8xf32> to vector<16xf32>
    %119 = vector.shape_cast %118 : vector<16xf32> to vector<16x1xf32>
    %120 = tpu.concatenate %107, %111, %115, %119 in 1 : vector<16x1xf32>, vector<16x1xf32>, vector<16x1xf32>, vector<16x1xf32> -> vector<16x4xf32>
    %cst_26 = arith.constant dense<0xFF800000> : vector<16xf32>
    %121 = vector.multi_reduction <maximumf>, %120, %cst_26 [1] : vector<16x4xf32> to vector<16xf32>
    %122 = vector.shape_cast %121 : vector<16xf32> to vector<16x1xf32>
    %123 = vector.broadcast %122 : vector<16x1xf32> to vector<16x4xf32>
    %124 = arith.subf %120, %123 : vector<16x4xf32>
    %125 = math.exp %124 : vector<16x4xf32>
    %cst_27 = arith.constant dense<0.000000e+00> : vector<16xf32>
    %126 = vector.multi_reduction <add>, %125, %cst_27 [1] : vector<16x4xf32> to vector<16xf32>
    %127 = vector.shape_cast %126 : vector<16xf32> to vector<16x1xf32>
    %128 = tpu.reciprocal %127 {approx = true} : vector<16x1xf32> -> vector<16x1xf32>
    %129 = vector.broadcast %128 : vector<16x1xf32> to vector<16x4xf32>
    %130 = arith.mulf %125, %129 : vector<16x4xf32>
    %131 = vector.extract_strided_slice %130 {offsets = [0, 0], sizes = [16, 1], strides = [1, 1]} : vector<16x4xf32> to vector<16x1xf32>
    %132 = vector.extract_strided_slice %6 {offsets = [0, 0], sizes = [16, 8], strides = [1, 1]} : vector<16x32xf32> to vector<16x8xf32>
    %133 = vector.broadcast %131 : vector<16x1xf32> to vector<16x8xf32>
    %134 = arith.mulf %133, %132 : vector<16x8xf32>
    %135 = vector.extract_strided_slice %130 {offsets = [0, 1], sizes = [16, 1], strides = [1, 1]} : vector<16x4xf32> to vector<16x1xf32>
    %136 = vector.extract_strided_slice %6 {offsets = [0, 8], sizes = [16, 8], strides = [1, 1]} : vector<16x32xf32> to vector<16x8xf32>
    %137 = vector.broadcast %135 : vector<16x1xf32> to vector<16x8xf32>
    %138 = arith.mulf %137, %136 : vector<16x8xf32>
    %139 = arith.addf %134, %138 : vector<16x8xf32>
    %140 = vector.extract_strided_slice %130 {offsets = [0, 2], sizes = [16, 1], strides = [1, 1]} : vector<16x4xf32> to vector<16x1xf32>
    %141 = vector.extract_strided_slice %6 {offsets = [0, 16], sizes = [16, 8], strides = [1, 1]} : vector<16x32xf32> to vector<16x8xf32>
    %142 = vector.broadcast %140 : vector<16x1xf32> to vector<16x8xf32>
    %143 = arith.mulf %142, %141 : vector<16x8xf32>
    %144 = arith.addf %139, %143 : vector<16x8xf32>
    %145 = vector.extract_strided_slice %130 {offsets = [0, 3], sizes = [16, 1], strides = [1, 1]} : vector<16x4xf32> to vector<16x1xf32>
    %146 = vector.extract_strided_slice %6 {offsets = [0, 24], sizes = [16, 8], strides = [1, 1]} : vector<16x32xf32> to vector<16x8xf32>
    %147 = vector.broadcast %145 : vector<16x1xf32> to vector<16x8xf32>
    %148 = arith.mulf %147, %146 : vector<16x8xf32>
    %149 = arith.addf %144, %148 : vector<16x8xf32>
    %150 = vector.extract_strided_slice %8 {offsets = [0, 24], sizes = [16, 8], strides = [1, 1]} : vector<16x32xf32> to vector<16x8xf32>
    %151 = vector.extract_strided_slice %4 {offsets = [0, 0], sizes = [16, 8], strides = [1, 1]} : vector<16x32xf32> to vector<16x8xf32>
    %152 = arith.mulf %150, %151 : vector<16x8xf32>
    %cst_28 = arith.constant dense<0.000000e+00> : vector<16xf32>
    %153 = vector.multi_reduction <add>, %152, %cst_28 [1] : vector<16x8xf32> to vector<16xf32>
    %154 = vector.shape_cast %153 : vector<16xf32> to vector<16x1xf32>
    %155 = vector.extract_strided_slice %4 {offsets = [0, 8], sizes = [16, 8], strides = [1, 1]} : vector<16x32xf32> to vector<16x8xf32>
    %156 = arith.mulf %150, %155 : vector<16x8xf32>
    %cst_29 = arith.constant dense<0.000000e+00> : vector<16xf32>
    %157 = vector.multi_reduction <add>, %156, %cst_29 [1] : vector<16x8xf32> to vector<16xf32>
    %158 = vector.shape_cast %157 : vector<16xf32> to vector<16x1xf32>
    %159 = vector.extract_strided_slice %4 {offsets = [0, 16], sizes = [16, 8], strides = [1, 1]} : vector<16x32xf32> to vector<16x8xf32>
    %160 = arith.mulf %150, %159 : vector<16x8xf32>
    %cst_30 = arith.constant dense<0.000000e+00> : vector<16xf32>
    %161 = vector.multi_reduction <add>, %160, %cst_30 [1] : vector<16x8xf32> to vector<16xf32>
    %162 = vector.shape_cast %161 : vector<16xf32> to vector<16x1xf32>
    %163 = vector.extract_strided_slice %4 {offsets = [0, 24], sizes = [16, 8], strides = [1, 1]} : vector<16x32xf32> to vector<16x8xf32>
    %164 = arith.mulf %150, %163 : vector<16x8xf32>
    %cst_31 = arith.constant dense<0.000000e+00> : vector<16xf32>
    %165 = vector.multi_reduction <add>, %164, %cst_31 [1] : vector<16x8xf32> to vector<16xf32>
    %166 = vector.shape_cast %165 : vector<16xf32> to vector<16x1xf32>
    %167 = tpu.concatenate %154, %158, %162, %166 in 1 : vector<16x1xf32>, vector<16x1xf32>, vector<16x1xf32>, vector<16x1xf32> -> vector<16x4xf32>
    %cst_32 = arith.constant dense<0xFF800000> : vector<16xf32>
    %168 = vector.multi_reduction <maximumf>, %167, %cst_32 [1] : vector<16x4xf32> to vector<16xf32>
    %169 = vector.shape_cast %168 : vector<16xf32> to vector<16x1xf32>
    %170 = vector.broadcast %169 : vector<16x1xf32> to vector<16x4xf32>
    %171 = arith.subf %167, %170 : vector<16x4xf32>
    %172 = math.exp %171 : vector<16x4xf32>
    %cst_33 = arith.constant dense<0.000000e+00> : vector<16xf32>
    %173 = vector.multi_reduction <add>, %172, %cst_33 [1] : vector<16x4xf32> to vector<16xf32>
    %174 = vector.shape_cast %173 : vector<16xf32> to vector<16x1xf32>
    %175 = tpu.reciprocal %174 {approx = true} : vector<16x1xf32> -> vector<16x1xf32>
    %176 = vector.broadcast %175 : vector<16x1xf32> to vector<16x4xf32>
    %177 = arith.mulf %172, %176 : vector<16x4xf32>
    %178 = vector.extract_strided_slice %177 {offsets = [0, 0], sizes = [16, 1], strides = [1, 1]} : vector<16x4xf32> to vector<16x1xf32>
    %179 = vector.extract_strided_slice %6 {offsets = [0, 0], sizes = [16, 8], strides = [1, 1]} : vector<16x32xf32> to vector<16x8xf32>
    %180 = vector.broadcast %178 : vector<16x1xf32> to vector<16x8xf32>
    %181 = arith.mulf %180, %179 : vector<16x8xf32>
    %182 = vector.extract_strided_slice %177 {offsets = [0, 1], sizes = [16, 1], strides = [1, 1]} : vector<16x4xf32> to vector<16x1xf32>
    %183 = vector.extract_strided_slice %6 {offsets = [0, 8], sizes = [16, 8], strides = [1, 1]} : vector<16x32xf32> to vector<16x8xf32>
    %184 = vector.broadcast %182 : vector<16x1xf32> to vector<16x8xf32>
    %185 = arith.mulf %184, %183 : vector<16x8xf32>
    %186 = arith.addf %181, %185 : vector<16x8xf32>
    %187 = vector.extract_strided_slice %177 {offsets = [0, 2], sizes = [16, 1], strides = [1, 1]} : vector<16x4xf32> to vector<16x1xf32>
    %188 = vector.extract_strided_slice %6 {offsets = [0, 16], sizes = [16, 8], strides = [1, 1]} : vector<16x32xf32> to vector<16x8xf32>
    %189 = vector.broadcast %187 : vector<16x1xf32> to vector<16x8xf32>
    %190 = arith.mulf %189, %188 : vector<16x8xf32>
    %191 = arith.addf %186, %190 : vector<16x8xf32>
    %192 = vector.extract_strided_slice %177 {offsets = [0, 3], sizes = [16, 1], strides = [1, 1]} : vector<16x4xf32> to vector<16x1xf32>
    %193 = vector.extract_strided_slice %6 {offsets = [0, 24], sizes = [16, 8], strides = [1, 1]} : vector<16x32xf32> to vector<16x8xf32>
    %194 = vector.broadcast %192 : vector<16x1xf32> to vector<16x8xf32>
    %195 = arith.mulf %194, %193 : vector<16x8xf32>
    %196 = arith.addf %191, %195 : vector<16x8xf32>
    %197 = tpu.concatenate %55, %102, %149, %196 in 1 : vector<16x8xf32>, vector<16x8xf32>, vector<16x8xf32>, vector<16x8xf32> -> vector<16x32xf32>
    %c0_34 = arith.constant 0 : index
    %c0_35 = arith.constant 0 : index
    %198 = vector.load %arg5[%c0_34, %c0_35] : memref<32x32xf32, #tpu.memory_space<vmem>>, vector<32x32xf32>
    %cst_36 = arith.constant dense<0.000000e+00> : vector<16x32xf32>
    %199 = tpu.matmul %197, %198, %cst_36 {dimension_numbers = #tpu.dot_dimension_numbers<[1], [0], [0], [1], [0, 0, 1, 1], [], []>} : vector<16x32xf32>, vector<32x32xf32>, vector<16x32xf32> -> vector<16x32xf32>
    %c0_37 = arith.constant 0 : index
    %c0_38 = arith.constant 0 : index
    %200 = vector.load %arg6[%c0_37, %c0_38] : memref<16x32xf32, #tpu.memory_space<vmem>>, vector<16x32xf32>
    tpu.vector_store %arg6[%c0_37, %c0_38], %199 {strides = array<i32>} : memref<16x32xf32, #tpu.memory_space<vmem>>, vector<16x32xf32>,
    return
  }
  func.func @transform_0(%arg0: i32) -> (i32, i32) {
    %c0_i32 = arith.constant 0 : i32
    %c0_i32_0 = arith.constant 0 : i32
    return %arg0, %c0_i32 : i32, i32
  }
  func.func @transform_1(%arg0: i32) -> (i32, i32) {
    %c0_i32 = arith.constant 0 : i32
    %c0_i32_0 = arith.constant 0 : i32
    %c0_i32_1 = arith.constant 0 : i32
    return %c0_i32, %c0_i32_0 : i32, i32
  }
  func.func @transform_2(%arg0: i32) -> (i32, i32) {
    %c0_i32 = arith.constant 0 : i32
    %c0_i32_0 = arith.constant 0 : i32
    %c0_i32_1 = arith.constant 0 : i32
    return %c0_i32, %c0_i32_0 : i32, i32
  }
  func.func @transform_3(%arg0: i32) -> (i32, i32) {
    %c0_i32 = arith.constant 0 : i32
    %c0_i32_0 = arith.constant 0 : i32
    %c0_i32_1 = arith.constant 0 : i32
    return %c0_i32, %c0_i32_0 : i32, i32
  }
  func.func @transform_4(%arg0: i32) -> (i32, i32) {
    %c0_i32 = arith.constant 0 : i32
    %c0_i32_0 = arith.constant 0 : i32
    %c0_i32_1 = arith.constant 0 : i32
    return %c0_i32, %c0_i32_0 : i32, i32
  }
  func.func @transform_5(%arg0: i32) -> (i32, i32) {
    %c0_i32 = arith.constant 0 : i32
    %c0_i32_0 = arith.constant 0 : i32
    return %arg0, %c0_i32 : i32, i32
  }
}

</mosaic_0001>

<llo_original>
// kernel: tpu_custom_call.1
$region0: #{tpu_custom_call.1}
  #allocation0 [shape = 'u32[]', space=smem, size = 0x4, offset = 0x4, fixed_abs, tag = 'smem constant byte address 0x4 - core index']
  #allocation1 [shape = 'u32[72,128]{1,0:T(1,128)}', space=vmem, size = 0x9000, scoped, tag = 'internal scratch']
  %s0 = inlined_call_operand.hbm [shape: f32[16,32], index: 0, kind: input, shape index: {}]
  %s1 = inlined_call_operand.hbm [shape: f32[32,32], index: 1, kind: input, shape index: {}]
  %s2 = inlined_call_operand.hbm [shape: f32[32,32], index: 2, kind: input, shape index: {}]
  %s3 = inlined_call_operand.hbm [shape: f32[32,32], index: 3, kind: input, shape index: {}]
  %s4 = inlined_call_operand.hbm [shape: f32[32,32], index: 4, kind: input, shape index: {}]
  %s5 = inlined_call_operand.hbm [shape: f32[16,32], index: 5, kind: output, shape index: {}]
  %s6 = sld [smem:[#allocation0]]
  $region50: #{tpu_custom_call.1} parent=0
    _
  %s8 = ssub.s32 1, %s6
  %s9 = scalar_select 0, %s8, %s6
  $region1: #{tpu_custom_call.1} parent=0
    #allocation2 [shape = 'u8[8192]{0}', space=vmem, size = 0x2000, scoped, tag = 'input window, operand 0, single buffered']
    #allocation3 [shape = 's32[1]{0}', space=sflag, size = 0x4, scoped, tag = 'scoped memory for tpu_custom_call.1']
    #allocation4 [shape = 's32[1]{0}', space=sflag, size = 0x4, scoped, tag = 'scoped memory for tpu_custom_call.1']
    #allocation5 [shape = 'u8[16384]{0}', space=vmem, size = 0x4000, scoped, tag = 'input window, operand 1, single buffered']
    #allocation6 [shape = 's32[1]{0}', space=sflag, size = 0x4, scoped, tag = 'scoped memory for tpu_custom_call.1']
    #allocation7 [shape = 'u8[16384]{0}', space=vmem, size = 0x4000, scoped, tag = 'input window, operand 2, single buffered']
    #allocation8 [shape = 'u8[16384]{0}', space=vmem, size = 0x4000, scoped, tag = 'input window, operand 3, single buffered']
    #allocation9 [shape = 's32[1]{0}', space=sflag, size = 0x4, scoped, tag = 'scoped memory for tpu_custom_call.1']
    #allocation10 [shape = 'u8[16384]{0}', space=vmem, size = 0x4000, scoped, tag = 'input window, operand 4, single buffered']
    #allocation11 [shape = 'u8[8192]{0}', space=vmem, size = 0x2000, scoped, tag = 'output window, operand 0, single buffered']
    %10 = vsyncpa [#allocation3], 0
    %11 = vsyncpa [#allocation6], 0
    %12 = vsyncpa [#allocation9], 0
    %13 = vsyncpa [#allocation4], 0
    // Predicated region
    $region2: #{tpu_custom_call.1} parent=1 // pred_check
      _
    $region3: #{tpu_custom_call.1} parent=1 // pred_check_branch
      %15 = sbr.rel (0) target = $region5
    $region4: #{tpu_custom_call.1} parent=1 // pred_region
      %17 = vsyncadd [#allocation3], 0
      %s18 = sshll.u32 %s0, 4
      %s19 = int_to_ptr.hbm [resolvable:$true] %s18
      %s20 = sshll.u32 [#allocation2], 4
      %s21 = int_to_ptr.vmem [resolvable:$true] %s20
      %26 = dma.hbm_to_vmem [thread:$0]  %s19, 256, %s21, [#allocation3], 128, 128, 8
    $region5: #{tpu_custom_call.1} parent=1 // pred_fallthru
      _
    // Predicated region
    $region6: #{tpu_custom_call.1} parent=1 // pred_check
      _
    $region7: #{tpu_custom_call.1} parent=1 // pred_check_branch
      %28 = sbr.rel (0) target = $region9
    $region8: #{tpu_custom_call.1} parent=1 // pred_region
      %30 = vsyncadd [#allocation6], 0
      %s31 = sshll.u32 %s1, 4
      %s32 = int_to_ptr.hbm [resolvable:$true] %s31
      %s33 = sshll.u32 [#allocation5], 4
      %s34 = int_to_ptr.vmem [resolvable:$true] %s33
      %39 = dma.hbm_to_vmem [thread:$0]  %s32, 512, %s34, [#allocation6], 128, 128, 8
    $region9: #{tpu_custom_call.1} parent=1 // pred_fallthru
      _
    // Predicated region
    $region10: #{tpu_custom_call.1} parent=1 // pred_check
      _
    $region11: #{tpu_custom_call.1} parent=1 // pred_check_branch
      %41 = sbr.rel (0) target = $region13
    $region12: #{tpu_custom_call.1} parent=1 // pred_region
      %43 = vsyncadd [#allocation6], 0
      %s44 = sshll.u32 %s2, 4
      %s45 = int_to_ptr.hbm [resolvable:$true] %s44
      %s46 = sshll.u32 [#allocation7], 4
      %s47 = int_to_ptr.vmem [resolvable:$true] %s46
      %52 = dma.hbm_to_vmem [thread:$0]  %s45, 512, %s47, [#allocation6], 128, 128, 8
    $region13: #{tpu_custom_call.1} parent=1 // pred_fallthru
      _
    // Predicated region
    $region14: #{tpu_custom_call.1} parent=1 // pred_check
      _
    $region15: #{tpu_custom_call.1} parent=1 // pred_check_branch
      %54 = sbr.rel (0) target = $region17
    $region16: #{tpu_custom_call.1} parent=1 // pred_region
      %56 = vsyncadd [#allocation9], 0
      %s57 = sshll.u32 %s3, 4
      %s58 = int_to_ptr.hbm [resolvable:$true] %s57
      %s59 = sshll.u32 [#allocation8], 4
      %s60 = int_to_ptr.vmem [resolvable:$true] %s59
      %65 = dma.hbm_to_vmem [thread:$0]  %s58, 512, %s60, [#allocation9], 128, 128, 8
    $region17: #{tpu_custom_call.1} parent=1 // pred_fallthru
      _
    // Predicated region
    $region18: #{tpu_custom_call.1} parent=1 // pred_check
      _
    $region19: #{tpu_custom_call.1} parent=1 // pred_check_branch
      %67 = sbr.rel (0) target = $region21
    $region20: #{tpu_custom_call.1} parent=1 // pred_region
      %69 = vsyncadd [#allocation9], 0
      %s70 = sshll.u32 %s4, 4
      %s71 = int_to_ptr.hbm [resolvable:$true] %s70
      %s72 = sshll.u32 [#allocation10], 4
      %s73 = int_to_ptr.vmem [resolvable:$true] %s72
      %78 = dma.hbm_to_vmem [thread:$0]  %s71, 512, %s73, [#allocation9], 128, 128, 8
    $region21: #{tpu_custom_call.1} parent=1 // pred_fallthru
      _
    // Predicated region
    $region22: #{tpu_custom_call.1} parent=1 // pred_check
      _
    $region23: #{tpu_custom_call.1} parent=1 // pred_check_branch
      %80 = sbr.rel (0) target = $region25
    $region24: #{tpu_custom_call.1} parent=1 // pred_region
      %82 = dma.done [#allocation3], 256
    $region25: #{tpu_custom_call.1} parent=1 // pred_fallthru
      _
    // Predicated region
    $region26: #{tpu_custom_call.1} parent=1 // pred_check
      _
    $region27: #{tpu_custom_call.1} parent=1 // pred_check_branch
      %84 = sbr.rel (0) target = $region29
    $region28: #{tpu_custom_call.1} parent=1 // pred_region
      %86 = dma.done [#allocation6], 512
    $region29: #{tpu_custom_call.1} parent=1 // pred_fallthru
      _
    // Predicated region
    $region30: #{tpu_custom_call.1} parent=1 // pred_check
      _
    $region31: #{tpu_custom_call.1} parent=1 // pred_check_branch
      %88 = sbr.rel (0) target = $region33
    $region32: #{tpu_custom_call.1} parent=1 // pred_region
      %90 = dma.done [#allocation6], 512
    $region33: #{tpu_custom_call.1} parent=1 // pred_fallthru
      _
    // Predicated region
    $region34: #{tpu_custom_call.1} parent=1 // pred_check
      _
    $region35: #{tpu_custom_call.1} parent=1 // pred_check_branch
      %92 = sbr.rel (0) target = $region37
    $region36: #{tpu_custom_call.1} parent=1 // pred_region
      %94 = dma.done [#allocation9], 512
    $region37: #{tpu_custom_call.1} parent=1 // pred_fallthru
      _
    // Predicated region
    $region38: #{tpu_custom_call.1} parent=1 // pred_check
      _
    $region39: #{tpu_custom_call.1} parent=1 // pred_check_branch
      %96 = sbr.rel (0) target = $region41
    $region40: #{tpu_custom_call.1} parent=1 // pred_region
      %98 = dma.done [#allocation9], 512
    $region41: #{tpu_custom_call.1} parent=1 // pred_fallthru
      _
    %v99 = vld [vmem:[#allocation2] sm:$0xff]
    %v100 = vld [vmem:[#allocation2 + $0x8] sm:$0xff]
    %v101 = vld [vmem:[#allocation5] sm:$0xff]
    %v102 = vld [vmem:[#allocation5 + $0x8] sm:$0xff]
    %v103 = vld [vmem:[#allocation5 + $0x10] sm:$0xff]
    %v104 = vld [vmem:[#allocation5 + $0x18] sm:$0xff]
    %vm105 = vcmask 261120
    %v107 = vsel %vm105, %v99, 0
    %v110 = vsel %vm105, %v100, 0
    %112 = vmatpush.msra.mxu0 0.0
    %113 = vmatpush.msra.mxu0 0.0
    %114 = vmatpush.msra.mxu0 0.0
    %115 = vmatpush.msra.mxu0 0.0
    %116 = vmatpush.msra.mxu0 0.0
    %117 = vmatpush.msra.mxu0 0.0
    %118 = vmatpush.msra.mxu0 0.0
    %119 = vmatpush.msra.mxu0 0.0
    %120 = vmatpush.msra.mxu0 0.0
    %121 = vmatpush.msra.mxu0 0.0
    %122 = vmatpush.msra.mxu0 0.0
    %123 = vmatpush.msra.mxu0 0.0
    %124 = vmatpush.msra.mxu0 %v104
    %125 = vmatpush.msra.mxu0 %v103
    %126 = vmatpush.msra.mxu0 %v102
    %127 = vmatpush.msra.mxu0 %v101
    %128 = vmatmul.f32.gmra.mxu0 %v107
    %v129 = vpop.f32.mrf.mxu0
    %v130 = vadd.f32 0.0, %v129
    %131 = vmatmul.f32.gmra.mxu0 %v110
    %v132 = vpop.f32.mrf.mxu0
    %v133 = vadd.f32 0.0, %v132
    %134 = vdwg.mxu0
    %v135 = vld [vmem:[#allocation7] sm:$0xff]
    %v136 = vld [vmem:[#allocation7 + $0x8] sm:$0xff]
    %v137 = vld [vmem:[#allocation7 + $0x10] sm:$0xff]
    %v138 = vld [vmem:[#allocation7 + $0x18] sm:$0xff]
    %139 = vmatpush.msra.mxu0 0.0
    %140 = vmatpush.msra.mxu0 0.0
    %141 = vmatpush.msra.mxu0 0.0
    %142 = vmatpush.msra.mxu0 0.0
    %143 = vmatpush.msra.mxu0 0.0
    %144 = vmatpush.msra.mxu0 0.0
    %145 = vmatpush.msra.mxu0 0.0
    %146 = vmatpush.msra.mxu0 0.0
    %147 = vmatpush.msra.mxu0 0.0
    %148 = vmatpush.msra.mxu0 0.0
    %149 = vmatpush.msra.mxu0 0.0
    %150 = vmatpush.msra.mxu0 0.0
    %151 = vmatpush.msra.mxu0 %v138
    %152 = vmatpush.msra.mxu0 %v137
    %153 = vmatpush.msra.mxu0 %v136
    %154 = vmatpush.msra.mxu0 %v135
    %155 = vmatmul.f32.gmra.mxu0 %v107
    %v156 = vpop.f32.mrf.mxu0
    %v157 = vadd.f32 0.0, %v156
    %158 = vmatmul.f32.gmra.mxu0 %v110
    %v159 = vpop.f32.mrf.mxu0
    %v160 = vadd.f32 0.0, %v159
    %161 = vdwg.mxu0
    %v162 = vld [vmem:[#allocation8] sm:$0xff]
    %v163 = vld [vmem:[#allocation8 + $0x8] sm:$0xff]
    %v164 = vld [vmem:[#allocation8 + $0x10] sm:$0xff]
    %v165 = vld [vmem:[#allocation8 + $0x18] sm:$0xff]
    %166 = vmatpush.msra.mxu0 0.0
    %167 = vmatpush.msra.mxu0 0.0
    %168 = vmatpush.msra.mxu0 0.0
    %169 = vmatpush.msra.mxu0 0.0
    %170 = vmatpush.msra.mxu0 0.0
    %171 = vmatpush.msra.mxu0 0.0
    %172 = vmatpush.msra.mxu0 0.0
    %173 = vmatpush.msra.mxu0 0.0
    %174 = vmatpush.msra.mxu0 0.0
    %175 = vmatpush.msra.mxu0 0.0
    %176 = vmatpush.msra.mxu0 0.0
    %177 = vmatpush.msra.mxu0 0.0
    %178 = vmatpush.msra.mxu0 %v165
    %179 = vmatpush.msra.mxu0 %v164
    %180 = vmatpush.msra.mxu0 %v163
    %181 = vmatpush.msra.mxu0 %v162
    %182 = vmatmul.f32.gmra.mxu0 %v107
    %v183 = vpop.f32.mrf.mxu0
    %v184 = vadd.f32 0.0, %v183
    %185 = vmatmul.f32.gmra.mxu0 %v110
    %v186 = vpop.f32.mrf.mxu0
    %v187 = vadd.f32 0.0, %v186
    %188 = vdwg.mxu0
    %v189 = vmul.f32 %v130, 0.35355338
    %v190 = vmul.f32 %v133, 0.35355338
    %v191 = vmul.f32 %v189, %v157
    %v192 = vmul.f32 %v190, %v160
    %vm193 = vcmask 64512
    %v194 = vsel %vm193, %v191, 0.0
    %195 = vadd.xlane.f32.xlu0 %v194
    %v196 = vpop.xlane.xlu0 %195
    %v197 = vsel %vm193, %v192, 0.0
    %198 = vadd.xlane.f32.xlu0 %v197
    %v199 = vpop.xlane.xlu0 %198
    %202 = vrot.lane.b32.xlu0 %v157, 120
    %v203 = vpop.permute.xlu0 %202
    %204 = vrot.lane.b32.xlu0 %v160, 120
    %v205 = vpop.permute.xlu0 %204
    %v208 = vmul.f32 %v189, %v203
    %v209 = vmul.f32 %v190, %v205
    %v210 = vsel %vm193, %v208, 0.0
    %211 = vadd.xlane.f32.xlu0 %v210
    %v212 = vpop.xlane.xlu0 %211
    %v213 = vsel %vm193, %v209, 0.0
    %214 = vadd.xlane.f32.xlu0 %v213
    %v215 = vpop.xlane.xlu0 %214
    %216 = vrot.lane.b32.xlu0 %v157, 112
    %v217 = vpop.permute.xlu0 %216
    %218 = vrot.lane.b32.xlu0 %v160, 112
    %v219 = vpop.permute.xlu0 %218
    %v222 = vmul.f32 %v189, %v217
    %v223 = vmul.f32 %v190, %v219
    %v224 = vsel %vm193, %v222, 0.0
    %225 = vadd.xlane.f32.xlu0 %v224
    %v226 = vpop.xlane.xlu0 %225
    %v227 = vsel %vm193, %v223, 0.0
    %228 = vadd.xlane.f32.xlu0 %v227
    %v229 = vpop.xlane.xlu0 %228
    %230 = vrot.lane.b32.xlu0 %v157, 104
    %v231 = vpop.permute.xlu0 %230
    %232 = vrot.lane.b32.xlu0 %v160, 104
    %v233 = vpop.permute.xlu0 %232
    %v236 = vmul.f32 %v189, %v231
    %v237 = vmul.f32 %v190, %v233
    %v238 = vsel %vm193, %v236, 0.0
    %239 = vadd.xlane.f32.xlu0 %v238
    %v240 = vpop.xlane.xlu0 %239
    %v241 = vsel %vm193, %v237, 0.0
    %242 = vadd.xlane.f32.xlu0 %v241
    %v243 = vpop.xlane.xlu0 %242
    %vm244 = vcmask 7168
    %v245 = vsel %vm244, %v196, %v212
    %v246 = vsel %vm244, %v199, %v215
    %vm247 = vcmask 15360
    %v248 = vsel %vm247, %v245, %v226
    %v249 = vsel %vm247, %v246, %v229
    %vm250 = vcmask 23552
    %v251 = vsel %vm250, %v248, %v240
    %v252 = vsel %vm250, %v249, %v243
    %vm253 = vcmask 31744
    %v254 = vsel %vm253, %v251, -inf
    %255 = vmax.xlane.f32.xlu0 %v254
    %v256 = vpop.xlane.xlu0 %255
    %v257 = vsel %vm253, %v252, -inf
    %258 = vmax.xlane.f32.xlu0 %v257
    %v259 = vpop.xlane.xlu0 %258
    %v260 = vsub.f32 %v251, %v256
    %v261 = vsub.f32 %v252, %v259
    %v262 = vmul.f32 %v260, 1.442695
    %v263 = vpow.pop %v262
    %v264 = vmul.f32 %v261, 1.442695
    %v265 = vpow.pop %v264
    %v266 = vsel %vm253, %v263, 0.0
    %267 = vadd.xlane.f32.xlu0 %v266
    %v268 = vpop.xlane.xlu0 %267
    %v269 = vsel %vm253, %v265, 0.0
    %270 = vadd.xlane.f32.xlu0 %v269
    %v271 = vpop.xlane.xlu0 %270
    %v272 = vrcp.pop %v268
    %v273 = vrcp.pop %v271
    %v274 = vmul.f32 %v263, %v272
    %v275 = vmul.f32 %v265, %v273
    %277 = vset.pattern.permute.xlu0 0
    %278 = vperm.xlu0 %277, %v274
    %v279 = vpop.permute.xlu0 %278
    %282 = vset.pattern.permute.xlu0 0
    %283 = vperm.xlu0 %282, %v275
    %v284 = vpop.permute.xlu0 %283
    %v286 = vmul.f32 %v279, %v184
    %v287 = vmul.f32 %v284, %v187
    %288 = vset.pattern.permute.xlu0 1
    %289 = vperm.xlu0 %288, %v274
    %v290 = vpop.permute.xlu0 %289
    %292 = vset.pattern.permute.xlu0 1
    %293 = vperm.xlu0 %292, %v275
    %v294 = vpop.permute.xlu0 %293
    %v296 = vmul.f32 %v290, %v184
    %v297 = vmul.f32 %v294, %v187
    %300 = vrot.lane.b32.xlu0 %v296, 120
    %v301 = vpop.permute.xlu0 %300
    %302 = vrot.lane.b32.xlu0 %v297, 120
    %v303 = vpop.permute.xlu0 %302
    %v306 = vadd.f32 %v286, %v301
    %v307 = vadd.f32 %v287, %v303
    %308 = vset.pattern.permute.xlu0 2
    %309 = vperm.xlu0 %308, %v274
    %v310 = vpop.permute.xlu0 %309
    %312 = vset.pattern.permute.xlu0 2
    %313 = vperm.xlu0 %312, %v275
    %v314 = vpop.permute.xlu0 %313
    %v316 = vmul.f32 %v310, %v184
    %v317 = vmul.f32 %v314, %v187
    %320 = vrot.lane.b32.xlu0 %v316, 112
    %v321 = vpop.permute.xlu0 %320
    %322 = vrot.lane.b32.xlu0 %v317, 112
    %v323 = vpop.permute.xlu0 %322
    %v326 = vadd.f32 %v306, %v321
    %v327 = vadd.f32 %v307, %v323
    %328 = vset.pattern.permute.xlu0 3
    %329 = vperm.xlu0 %328, %v274
    %v330 = vpop.permute.xlu0 %329
    %332 = vset.pattern.permute.xlu0 3
    %333 = vperm.xlu0 %332, %v275
    %v334 = vpop.permute.xlu0 %333
    %v336 = vmul.f32 %v330, %v184
    %v337 = vmul.f32 %v334, %v187
    %340 = vrot.lane.b32.xlu0 %v336, 104
    %v341 = vpop.permute.xlu0 %340
    %342 = vrot.lane.b32.xlu0 %v337, 104
    %v343 = vpop.permute.xlu0 %342
    %v346 = vadd.f32 %v326, %v341
    %v347 = vadd.f32 %v327, %v343
    %348 = vrot.lane.b32.xlu0 %v157, 8
    %v349 = vpop.permute.xlu0 %348
    %350 = vrot.lane.b32.xlu0 %v160, 8
    %v351 = vpop.permute.xlu0 %350
    %v354 = vmul.f32 %v189, %v349
    %v355 = vmul.f32 %v190, %v351
    %358 = vrot.lane.b32.xlu0 %v354, 120
    %v359 = vpop.permute.xlu0 %358
    %360 = vrot.lane.b32.xlu0 %v355, 120
    %v361 = vpop.permute.xlu0 %360
    %v364 = vsel %vm193, %v359, 0.0
    %365 = vadd.xlane.f32.xlu0 %v364
    %v366 = vpop.xlane.xlu0 %365
    %v367 = vsel %vm193, %v361, 0.0
    %368 = vadd.xlane.f32.xlu0 %v367
    %v369 = vpop.xlane.xlu0 %368
    %372 = vrot.lane.b32.xlu0 %v191, 120
    %v373 = vpop.permute.xlu0 %372
    %374 = vrot.lane.b32.xlu0 %v192, 120
    %v375 = vpop.permute.xlu0 %374
    %v378 = vsel %vm193, %v373, 0.0
    %379 = vadd.xlane.f32.xlu0 %v378
    %v380 = vpop.xlane.xlu0 %379
    %v381 = vsel %vm193, %v375, 0.0
    %382 = vadd.xlane.f32.xlu0 %v381
    %v383 = vpop.xlane.xlu0 %382
    %386 = vrot.lane.b32.xlu0 %v208, 120
    %v387 = vpop.permute.xlu0 %386
    %388 = vrot.lane.b32.xlu0 %v209, 120
    %v389 = vpop.permute.xlu0 %388
    %v392 = vsel %vm193, %v387, 0.0
    %393 = vadd.xlane.f32.xlu0 %v392
    %v394 = vpop.xlane.xlu0 %393
    %v395 = vsel %vm193, %v389, 0.0
    %396 = vadd.xlane.f32.xlu0 %v395
    %v397 = vpop.xlane.xlu0 %396
    %400 = vrot.lane.b32.xlu0 %v222, 120
    %v401 = vpop.permute.xlu0 %400
    %402 = vrot.lane.b32.xlu0 %v223, 120
    %v403 = vpop.permute.xlu0 %402
    %v406 = vsel %vm193, %v401, 0.0
    %407 = vadd.xlane.f32.xlu0 %v406
    %v408 = vpop.xlane.xlu0 %407
    %v409 = vsel %vm193, %v403, 0.0
    %410 = vadd.xlane.f32.xlu0 %v409
    %v411 = vpop.xlane.xlu0 %410
    %v412 = vsel %vm244, %v366, %v380
    %v413 = vsel %vm244, %v369, %v383
    %v414 = vsel %vm247, %v412, %v394
    %v415 = vsel %vm247, %v413, %v397
    %v416 = vsel %vm250, %v414, %v408
    %v417 = vsel %vm250, %v415, %v411
    %v418 = vsel %vm253, %v416, -inf
    %419 = vmax.xlane.f32.xlu0 %v418
    %v420 = vpop.xlane.xlu0 %419
    %v421 = vsel %vm253, %v417, -inf
    %422 = vmax.xlane.f32.xlu0 %v421
    %v423 = vpop.xlane.xlu0 %422
    %v424 = vsub.f32 %v416, %v420
    %v425 = vsub.f32 %v417, %v423
    %v426 = vmul.f32 %v424, 1.442695
    %v427 = vpow.pop %v426
    %v428 = vmul.f32 %v425, 1.442695
    %v429 = vpow.pop %v428
    %v430 = vsel %vm253, %v427, 0.0
    %431 = vadd.xlane.f32.xlu0 %v430
    %v432 = vpop.xlane.xlu0 %431
    %v433 = vsel %vm253, %v429, 0.0
    %434 = vadd.xlane.f32.xlu0 %v433
    %v435 = vpop.xlane.xlu0 %434
    %v436 = vrcp.pop %v432
    %v437 = vrcp.pop %v435
    %v438 = vmul.f32 %v427, %v436
    %v439 = vmul.f32 %v429, %v437
    %441 = vset.pattern.permute.xlu0 0
    %442 = vperm.xlu0 %441, %v438
    %v443 = vpop.permute.xlu0 %442
    %446 = vset.pattern.permute.xlu0 0
    %447 = vperm.xlu0 %446, %v439
    %v448 = vpop.permute.xlu0 %447
    %v450 = vmul.f32 %v443, %v184
    %v451 = vmul.f32 %v448, %v187
    %452 = vset.pattern.permute.xlu0 1
    %453 = vperm.xlu0 %452, %v438
    %v454 = vpop.permute.xlu0 %453
    %456 = vset.pattern.permute.xlu0 1
    %457 = vperm.xlu0 %456, %v439
    %v458 = vpop.permute.xlu0 %457
    %v460 = vmul.f32 %v454, %v184
    %v461 = vmul.f32 %v458, %v187
    %464 = vrot.lane.b32.xlu0 %v460, 120
    %v465 = vpop.permute.xlu0 %464
    %466 = vrot.lane.b32.xlu0 %v461, 120
    %v467 = vpop.permute.xlu0 %466
    %v470 = vadd.f32 %v450, %v465
    %v471 = vadd.f32 %v451, %v467
    %472 = vset.pattern.permute.xlu0 2
    %473 = vperm.xlu0 %472, %v438
    %v474 = vpop.permute.xlu0 %473
    %476 = vset.pattern.permute.xlu0 2
    %477 = vperm.xlu0 %476, %v439
    %v478 = vpop.permute.xlu0 %477
    %v480 = vmul.f32 %v474, %v184
    %v481 = vmul.f32 %v478, %v187
    %484 = vrot.lane.b32.xlu0 %v480, 112
    %v485 = vpop.permute.xlu0 %484
    %486 = vrot.lane.b32.xlu0 %v481, 112
    %v487 = vpop.permute.xlu0 %486
    %v490 = vadd.f32 %v470, %v485
    %v491 = vadd.f32 %v471, %v487
    %492 = vset.pattern.permute.xlu0 3
    %493 = vperm.xlu0 %492, %v438
    %v494 = vpop.permute.xlu0 %493
    %496 = vset.pattern.permute.xlu0 3
    %497 = vperm.xlu0 %496, %v439
    %v498 = vpop.permute.xlu0 %497
    %v500 = vmul.f32 %v494, %v184
    %v501 = vmul.f32 %v498, %v187
    %504 = vrot.lane.b32.xlu0 %v500, 104
    %v505 = vpop.permute.xlu0 %504
    %506 = vrot.lane.b32.xlu0 %v501, 104
    %v507 = vpop.permute.xlu0 %506
    %v510 = vadd.f32 %v490, %v505
    %v511 = vadd.f32 %v491, %v507
    %512 = vrot.lane.b32.xlu0 %v157, 16
    %v513 = vpop.permute.xlu0 %512
    %514 = vrot.lane.b32.xlu0 %v160, 16
    %v515 = vpop.permute.xlu0 %514
    %v518 = vmul.f32 %v189, %v513
    %v519 = vmul.f32 %v190, %v515
    %522 = vrot.lane.b32.xlu0 %v518, 112
    %v523 = vpop.permute.xlu0 %522
    %524 = vrot.lane.b32.xlu0 %v519, 112
    %v525 = vpop.permute.xlu0 %524
    %v528 = vsel %vm193, %v523, 0.0
    %529 = vadd.xlane.f32.xlu0 %v528
    %v530 = vpop.xlane.xlu0 %529
    %v531 = vsel %vm193, %v525, 0.0
    %532 = vadd.xlane.f32.xlu0 %v531
    %v533 = vpop.xlane.xlu0 %532
    %534 = vrot.lane.b32.xlu0 %v354, 112
    %v535 = vpop.permute.xlu0 %534
    %536 = vrot.lane.b32.xlu0 %v355, 112
    %v537 = vpop.permute.xlu0 %536
    %v540 = vsel %vm193, %v535, 0.0
    %541 = vadd.xlane.f32.xlu0 %v540
    %v542 = vpop.xlane.xlu0 %541
    %v543 = vsel %vm193, %v537, 0.0
    %544 = vadd.xlane.f32.xlu0 %v543
    %v545 = vpop.xlane.xlu0 %544
    %546 = vrot.lane.b32.xlu0 %v191, 112
    %v547 = vpop.permute.xlu0 %546
    %548 = vrot.lane.b32.xlu0 %v192, 112
    %v549 = vpop.permute.xlu0 %548
    %v552 = vsel %vm193, %v547, 0.0
    %553 = vadd.xlane.f32.xlu0 %v552
    %v554 = vpop.xlane.xlu0 %553
    %v555 = vsel %vm193, %v549, 0.0
    %556 = vadd.xlane.f32.xlu0 %v555
    %v557 = vpop.xlane.xlu0 %556
    %558 = vrot.lane.b32.xlu0 %v208, 112
    %v559 = vpop.permute.xlu0 %558
    %560 = vrot.lane.b32.xlu0 %v209, 112
    %v561 = vpop.permute.xlu0 %560
    %v564 = vsel %vm193, %v559, 0.0
    %565 = vadd.xlane.f32.xlu0 %v564
    %v566 = vpop.xlane.xlu0 %565
    %v567 = vsel %vm193, %v561, 0.0
    %568 = vadd.xlane.f32.xlu0 %v567
    %v569 = vpop.xlane.xlu0 %568
    %v570 = vsel %vm244, %v530, %v542
    %v571 = vsel %vm244, %v533, %v545
    %v572 = vsel %vm247, %v570, %v554
    %v573 = vsel %vm247, %v571, %v557
    %v574 = vsel %vm250, %v572, %v566
    %v575 = vsel %vm250, %v573, %v569
    %v576 = vsel %vm253, %v574, -inf
    %577 = vmax.xlane.f32.xlu0 %v576
    %v578 = vpop.xlane.xlu0 %577
    %v579 = vsel %vm253, %v575, -inf
    %580 = vmax.xlane.f32.xlu0 %v579
    %v581 = vpop.xlane.xlu0 %580
    %v582 = vsub.f32 %v574, %v578
    %v583 = vsub.f32 %v575, %v581
    %v584 = vmul.f32 %v582, 1.442695
    %v585 = vpow.pop %v584
    %v586 = vmul.f32 %v583, 1.442695
    %v587 = vpow.pop %v586
    %v588 = vsel %vm253, %v585, 0.0
    %589 = vadd.xlane.f32.xlu0 %v588
    %v590 = vpop.xlane.xlu0 %589
    %v591 = vsel %vm253, %v587, 0.0
    %592 = vadd.xlane.f32.xlu0 %v591
    %v593 = vpop.xlane.xlu0 %592
    %v594 = vrcp.pop %v590
    %v595 = vrcp.pop %v593
    %v596 = vmul.f32 %v585, %v594
    %v597 = vmul.f32 %v587, %v595
    %599 = vset.pattern.permute.xlu0 0
    %600 = vperm.xlu0 %599, %v596
    %v601 = vpop.permute.xlu0 %600
    %604 = vset.pattern.permute.xlu0 0
    %605 = vperm.xlu0 %604, %v597
    %v606 = vpop.permute.xlu0 %605
    %v608 = vmul.f32 %v601, %v184
    %v609 = vmul.f32 %v606, %v187
    %610 = vset.pattern.permute.xlu0 1
    %611 = vperm.xlu0 %610, %v596
    %v612 = vpop.permute.xlu0 %611
    %614 = vset.pattern.permute.xlu0 1
    %615 = vperm.xlu0 %614, %v597
    %v616 = vpop.permute.xlu0 %615
    %v618 = vmul.f32 %v612, %v184
    %v619 = vmul.f32 %v616, %v187
    %622 = vrot.lane.b32.xlu0 %v618, 120
    %v623 = vpop.permute.xlu0 %622
    %624 = vrot.lane.b32.xlu0 %v619, 120
    %v625 = vpop.permute.xlu0 %624
    %v628 = vadd.f32 %v608, %v623
    %v629 = vadd.f32 %v609, %v625
    %630 = vset.pattern.permute.xlu0 2
    %631 = vperm.xlu0 %630, %v596
    %v632 = vpop.permute.xlu0 %631
    %634 = vset.pattern.permute.xlu0 2
    %635 = vperm.xlu0 %634, %v597
    %v636 = vpop.permute.xlu0 %635
    %v638 = vmul.f32 %v632, %v184
    %v639 = vmul.f32 %v636, %v187
    %642 = vrot.lane.b32.xlu0 %v638, 112
    %v643 = vpop.permute.xlu0 %642
    %644 = vrot.lane.b32.xlu0 %v639, 112
    %v645 = vpop.permute.xlu0 %644
    %v648 = vadd.f32 %v628, %v643
    %v649 = vadd.f32 %v629, %v645
    %650 = vset.pattern.permute.xlu0 3
    %651 = vperm.xlu0 %650, %v596
    %v652 = vpop.permute.xlu0 %651
    %654 = vset.pattern.permute.xlu0 3
    %655 = vperm.xlu0 %654, %v597
    %v656 = vpop.permute.xlu0 %655
    %v658 = vmul.f32 %v652, %v184
    %v659 = vmul.f32 %v656, %v187
    %662 = vrot.lane.b32.xlu0 %v658, 104
    %v663 = vpop.permute.xlu0 %662
    %664 = vrot.lane.b32.xlu0 %v659, 104
    %v665 = vpop.permute.xlu0 %664
    %v668 = vadd.f32 %v648, %v663
    %v669 = vadd.f32 %v649, %v665
    %670 = vrot.lane.b32.xlu0 %v157, 24
    %v671 = vpop.permute.xlu0 %670
    %672 = vrot.lane.b32.xlu0 %v160, 24
    %v673 = vpop.permute.xlu0 %672
    %v676 = vmul.f32 %v189, %v671
    %v677 = vmul.f32 %v190, %v673
    %680 = vrot.lane.b32.xlu0 %v676, 104
    %v681 = vpop.permute.xlu0 %680
    %682 = vrot.lane.b32.xlu0 %v677, 104
    %v683 = vpop.permute.xlu0 %682
    %v686 = vsel %vm193, %v681, 0.0
    %687 = vadd.xlane.f32.xlu0 %v686
    %v688 = vpop.xlane.xlu0 %687
    %v689 = vsel %vm193, %v683, 0.0
    %690 = vadd.xlane.f32.xlu0 %v689
    %v691 = vpop.xlane.xlu0 %690
    %692 = vrot.lane.b32.xlu0 %v518, 104
    %v693 = vpop.permute.xlu0 %692
    %694 = vrot.lane.b32.xlu0 %v519, 104
    %v695 = vpop.permute.xlu0 %694
    %v698 = vsel %vm193, %v693, 0.0
    %699 = vadd.xlane.f32.xlu0 %v698
    %v700 = vpop.xlane.xlu0 %699
    %v701 = vsel %vm193, %v695, 0.0
    %702 = vadd.xlane.f32.xlu0 %v701
    %v703 = vpop.xlane.xlu0 %702
    %704 = vrot.lane.b32.xlu0 %v354, 104
    %v705 = vpop.permute.xlu0 %704
    %706 = vrot.lane.b32.xlu0 %v355, 104
    %v707 = vpop.permute.xlu0 %706
    %v710 = vsel %vm193, %v705, 0.0
    %711 = vadd.xlane.f32.xlu0 %v710
    %v712 = vpop.xlane.xlu0 %711
    %v713 = vsel %vm193, %v707, 0.0
    %714 = vadd.xlane.f32.xlu0 %v713
    %v715 = vpop.xlane.xlu0 %714
    %716 = vrot.lane.b32.xlu0 %v191, 104
    %v717 = vpop.permute.xlu0 %716
    %718 = vrot.lane.b32.xlu0 %v192, 104
    %v719 = vpop.permute.xlu0 %718
    %v722 = vsel %vm193, %v717, 0.0
    %723 = vadd.xlane.f32.xlu0 %v722
    %v724 = vpop.xlane.xlu0 %723
    %v725 = vsel %vm193, %v719, 0.0
    %726 = vadd.xlane.f32.xlu0 %v725
    %v727 = vpop.xlane.xlu0 %726
    %v728 = vsel %vm244, %v688, %v700
    %v729 = vsel %vm244, %v691, %v703
    %v730 = vsel %vm247, %v728, %v712
    %v731 = vsel %vm247, %v729, %v715
    %v732 = vsel %vm250, %v730, %v724
    %v733 = vsel %vm250, %v731, %v727
    %v734 = vsel %vm253, %v732, -inf
    %735 = vmax.xlane.f32.xlu0 %v734
    %v736 = vpop.xlane.xlu0 %735
    %v737 = vsel %vm253, %v733, -inf
    %738 = vmax.xlane.f32.xlu0 %v737
    %v739 = vpop.xlane.xlu0 %738
    %v740 = vsub.f32 %v732, %v736
    %v741 = vsub.f32 %v733, %v739
    %v742 = vmul.f32 %v740, 1.442695
    %v743 = vpow.pop %v742
    %v744 = vmul.f32 %v741, 1.442695
    %v745 = vpow.pop %v744
    %v746 = vsel %vm253, %v743, 0.0
    %747 = vadd.xlane.f32.xlu0 %v746
    %v748 = vpop.xlane.xlu0 %747
    %v749 = vsel %vm253, %v745, 0.0
    %750 = vadd.xlane.f32.xlu0 %v749
    %v751 = vpop.xlane.xlu0 %750
    %v752 = vrcp.pop %v748
    %v753 = vrcp.pop %v751
    %v754 = vmul.f32 %v743, %v752
    %v755 = vmul.f32 %v745, %v753
    %757 = vset.pattern.permute.xlu0 0
    %758 = vperm.xlu0 %757, %v754
    %v759 = vpop.permute.xlu0 %758
    %762 = vset.pattern.permute.xlu0 0
    %763 = vperm.xlu0 %762, %v755
    %v764 = vpop.permute.xlu0 %763
    %v766 = vmul.f32 %v759, %v184
    %v767 = vmul.f32 %v764, %v187
    %768 = vset.pattern.permute.xlu0 1
    %769 = vperm.xlu0 %768, %v754
    %v770 = vpop.permute.xlu0 %769
    %772 = vset.pattern.permute.xlu0 1
    %773 = vperm.xlu0 %772, %v755
    %v774 = vpop.permute.xlu0 %773
    %v776 = vmul.f32 %v770, %v184
    %v777 = vmul.f32 %v774, %v187
    %780 = vrot.lane.b32.xlu0 %v776, 120
    %v781 = vpop.permute.xlu0 %780
    %782 = vrot.lane.b32.xlu0 %v777, 120
    %v783 = vpop.permute.xlu0 %782
    %v786 = vadd.f32 %v766, %v781
    %v787 = vadd.f32 %v767, %v783
    %788 = vset.pattern.permute.xlu0 2
    %789 = vperm.xlu0 %788, %v754
    %v790 = vpop.permute.xlu0 %789
    %792 = vset.pattern.permute.xlu0 2
    %793 = vperm.xlu0 %792, %v755
    %v794 = vpop.permute.xlu0 %793
    %v796 = vmul.f32 %v790, %v184
    %v797 = vmul.f32 %v794, %v187
    %800 = vrot.lane.b32.xlu0 %v796, 112
    %v801 = vpop.permute.xlu0 %800
    %802 = vrot.lane.b32.xlu0 %v797, 112
    %v803 = vpop.permute.xlu0 %802
    %v806 = vadd.f32 %v786, %v801
    %v807 = vadd.f32 %v787, %v803
    %808 = vset.pattern.permute.xlu0 3
    %809 = vperm.xlu0 %808, %v754
    %v810 = vpop.permute.xlu0 %809
    %812 = vset.pattern.permute.xlu0 3
    %813 = vperm.xlu0 %812, %v755
    %v814 = vpop.permute.xlu0 %813
    %v816 = vmul.f32 %v810, %v184
    %v817 = vmul.f32 %v814, %v187
    %820 = vrot.lane.b32.xlu0 %v816, 104
    %v821 = vpop.permute.xlu0 %820
    %822 = vrot.lane.b32.xlu0 %v817, 104
    %v823 = vpop.permute.xlu0 %822
    %v826 = vadd.f32 %v806, %v821
    %v827 = vadd.f32 %v807, %v823
    %830 = vrot.lane.b32.xlu0 %v510, 8
    %v831 = vpop.permute.xlu0 %830
    %832 = vrot.lane.b32.xlu0 %v511, 8
    %v833 = vpop.permute.xlu0 %832
    %838 = vrot.lane.b32.xlu0 %v668, 16
    %v839 = vpop.permute.xlu0 %838
    %840 = vrot.lane.b32.xlu0 %v669, 16
    %v841 = vpop.permute.xlu0 %840
    %846 = vrot.lane.b32.xlu0 %v826, 24
    %v847 = vpop.permute.xlu0 %846
    %848 = vrot.lane.b32.xlu0 %v827, 24
    %v849 = vpop.permute.xlu0 %848
    %v852 = vsel %vm193, %v346, %v831
    %v853 = vsel %vm193, %v347, %v833
    %vm854 = vcmask 130048
    %v855 = vsel %vm854, %v852, %v839
    %v856 = vsel %vm854, %v853, %v841
    %vm857 = vcmask 195584
    %v858 = vsel %vm857, %v855, %v847
    %v859 = vsel %vm857, %v856, %v849
    %v860 = vld [vmem:[#allocation10] sm:$0xff]
    %v861 = vld [vmem:[#allocation10 + $0x8] sm:$0xff]
    %v862 = vld [vmem:[#allocation10 + $0x10] sm:$0xff]
    %v863 = vld [vmem:[#allocation10 + $0x18] sm:$0xff]
    %v865 = vsel %vm105, %v858, 0
    %v868 = vsel %vm105, %v859, 0
    %870 = vmatpush.msra.mxu0 0.0
    %871 = vmatpush.msra.mxu0 0.0
    %872 = vmatpush.msra.mxu0 0.0
    %873 = vmatpush.msra.mxu0 0.0
    %874 = vmatpush.msra.mxu0 0.0
    %875 = vmatpush.msra.mxu0 0.0
    %876 = vmatpush.msra.mxu0 0.0
    %877 = vmatpush.msra.mxu0 0.0
    %878 = vmatpush.msra.mxu0 0.0
    %879 = vmatpush.msra.mxu0 0.0
    %880 = vmatpush.msra.mxu0 0.0
    %881 = vmatpush.msra.mxu0 0.0
    %882 = vmatpush.msra.mxu0 %v863
    %883 = vmatpush.msra.mxu0 %v862
    %884 = vmatpush.msra.mxu0 %v861
    %885 = vmatpush.msra.mxu0 %v860
    %886 = vmatmul.f32.gmra.mxu0 %v865
    %v887 = vpop.f32.mrf.mxu0
    %v888 = vadd.f32 0.0, %v887
    %889 = vmatmul.f32.gmra.mxu0 %v868
    %v890 = vpop.f32.mrf.mxu0
    %v891 = vadd.f32 0.0, %v890
    %892 = vdwg.mxu0
    %893 = vst.msk [vmem:[#allocation11] sm:$0xff] %vm105, %v888
    %894 = vst.msk [vmem:[#allocation11 + $0x8] sm:$0xff] %vm105, %v891
    // Predicated region
    $region42: #{tpu_custom_call.1} parent=1 // pred_check
      _
    $region43: #{tpu_custom_call.1} parent=1 // pred_check_branch
      %896 = sbr.rel (0) target = $region45
    $region44: #{tpu_custom_call.1} parent=1 // pred_region
      %898 = vsyncadd [#allocation4], 0
      %s899 = sshll.u32 [#allocation11], 4
      %s900 = int_to_ptr.vmem [resolvable:$true] %s899
      %s901 = sshll.u32 %s5, 4
      %s902 = int_to_ptr.hbm [resolvable:$true] %s901
      %907 = dma.vmem_to_hbm [thread:$0]  %s900, 256, %s902, [#allocation4], 128, 128, 8
    $region45: #{tpu_custom_call.1} parent=1 // pred_fallthru
      _
    // Predicated region
    $region46: #{tpu_custom_call.1} parent=1 // pred_check
      _
    $region47: #{tpu_custom_call.1} parent=1 // pred_check_branch
      %909 = sbr.rel (0) target = $region49
    $region48: #{tpu_custom_call.1} parent=1 // pred_region
      %911 = dma.done [#allocation4], 256
    $region49: #{tpu_custom_call.1} parent=1 // pred_fallthru
      _
    %912 = vsyncpa [#allocation3], 1
    %913 = vsyncpa [#allocation6], 1
    %914 = vsyncpa [#allocation9], 1
    %915 = vsyncpa [#allocation4], 1

</llo_original>
